<compile_context>
chip_gen: v7x
topology: tpu7x:2x2x1
jax: 0.10.0
libtpu: 0.0.40
codegen_flags: <defaults>
</compile_context>

<pallas_src>
import functools

import jax
import jax.numpy as jnp
from jax import lax
from jax.experimental import pallas as pl
from jax.experimental.pallas import tpu as pltpu

_LANES = 128
_ACC_ROWS = 64   # accumulator sublane height -> 8 independent f32 vreg add chains
                 # (also a multiple of 16, so bf16 sublane packing stays aligned)


def _ultra_weighted_loss_kernel(pred_ref, target_ref, out_ref, acc_ref,
                                *, n_rows, gap_weight, tile_rows):
    i = pl.program_id(1)                      # inner axis = reduction over blocks

    # Zero the running per-lane sum-of-squares at the start of each split's sweep.
    @pl.when(i == 0)
    def _():
        acc_ref[...] = jnp.zeros_like(acc_ref)

    # (tile_rows, 128) lane-dense tile; cast to f32 in-kernel so HBM only streams
    # the native dtype.
    diff = pred_ref[...].astype(jnp.float32) - target_ref[...].astype(jnp.float32)
    sq = diff * diff

    # Fold the tile into a wide (64, 128) partial: tile_rows//64 adds spread over
    # 8 independent accumulation chains (pure VPU; the reshape stays on (8,128)
    # tile boundaries so it is layout-free).
    acc_ref[...] += jnp.sum(
        sq.reshape(tile_rows // _ACC_ROWS, _ACC_ROWS, _LANES), axis=0)

    # Finalize on the last reduction step: lane-parity weight + one scalar reduce.
    @pl.when(i == pl.num_programs(1) - 1)
    def _():
        # Row-major flatten of (N, 2): even flat indices carry L residuals, odd
        # carry gap residuals. 128 lanes is even, so lane parity == flat parity.
        lane = lax.broadcasted_iota(jnp.int32, (_ACC_ROWS, _LANES), 1)
        w = jnp.where(lane % 2 == 0, jnp.float32(1.0), jnp.float32(gap_weight))
        total = jnp.sum(acc_ref[...] * w, keepdims=True)      # (1, 1), one XLU reduce
        out_ref[...] = total * jnp.float32(1.0 / n_rows)


def ultra_weighted_loss(pred, target, gap_weight=50.0, max_tile_rows=8192):
    """Pallas implementation of UltraWeightedLoss.forward(pred, target)."""
    assert pred.shape == target.shape
    n, c = pred.shape
    assert c == 2, "UltraWeightedLoss expects 2 output columns (L, gap)"
    assert _LANES % 2 == 0, "lane-parity weight mask requires an even lane count"

    flat_len = n * c
    rows_needed = pl.cdiv(flat_len, _LANES)

    if rows_needed <= max_tile_rows:
        # Single block per split for small/medium N: no per-step grid overhead.
        tile_rows = max(_ACC_ROWS, pl.cdiv(rows_needed, _ACC_ROWS) * _ACC_ROWS)
    else:
        tile_rows = max_tile_rows               # 8192 rows = 4 MiB f32 per input block

    block_elems = tile_rows * _LANES
    n_blocks = pl.cdiv(flat_len, block_elems)

    # Leading "parallel" axis so v7x can shard the two halves of the block stream
    # across its two TensorCores; sequential (and nearly free) on v5e/v6e.
    num_splits = 2 if n_blocks >= 2 else 1
    n_blocks = pl.cdiv(n_blocks, num_splits) * num_splits
    blocks_per_split = n_blocks // num_splits
    padded_len = n_blocks * block_elems

    def to_lane_dense(x):
        # Native dtype kept; row-major flatten interleaves [L, gap, L, gap, ...].
        xf = x.reshape(-1)
        if padded_len != flat_len:
            xf = jnp.pad(xf, (0, padded_len - flat_len))      # zeros: exact no-op
        return xf.reshape(n_blocks * tile_rows, _LANES)

    pred_ld = to_lane_dense(pred)
    target_ld = to_lane_dense(target)

    kernel = functools.partial(
        _ultra_weighted_loss_kernel,
        n_rows=n, gap_weight=float(gap_weight), tile_rows=tile_rows)

    in_map = lambda s, i: (s * blocks_per_split + i, 0)

    out = pl.pallas_call(
        kernel,
        out_shape=jax.ShapeDtypeStruct((num_splits, 1), jnp.float32),
        grid_spec=pltpu.PrefetchScalarGridSpec(
            num_scalar_prefetch=0,
            grid=(num_splits, blocks_per_split),
            in_specs=[
                pl.BlockSpec((tile_rows, _LANES), in_map),
                pl.BlockSpec((tile_rows, _LANES), in_map),
            ],
            out_specs=pl.BlockSpec((1, 1), lambda s, i: (s, 0)),
            scratch_shapes=[pltpu.VMEM((_ACC_ROWS, _LANES), jnp.float32)],
        ),
        compiler_params=pltpu.CompilerParams(
            # split axis can shard across cores; block axis is the reduction.
            dimension_semantics=("parallel", "arbitrary"),
            # 2 inputs x 2 buffers x 4 MiB blocks exceed v5e's default scoped VMEM;
            # 32 MiB is safe on v5e/v6e (128 MiB phys) and v7x (64 MiB phys).
            vmem_limit_bytes=32 * 1024 * 1024,
            # Let XLA fuse the flatten/pad/reshape into the kernel's input DMAs
            # instead of materializing padded copies of pred/target in HBM.
            allow_input_fusion=[True, True],
        ),
    )(pred_ld, target_ld)

    # Sum per-split partials (each already scaled by 1/n) -> scalar loss.
    return jnp.sum(out)


def _reference_loss(pred, target, gap_weight=50.0):
    mse_L = (pred[:, 0] - target[:, 0]) ** 2
    mse_gap = (pred[:, 1] - target[:, 1]) ** 2
    return mse_L.mean() + gap_weight * mse_gap.mean()


if __name__ == "__main__":
    key = jax.random.PRNGKey(0)
    k1, k2, k3, k4, k5, k6 = jax.random.split(key, 6)

    # Small demo batch, consistent with the module's (N, 2) prediction layout.
    batch = 16
    pred = jax.random.normal(k1, (batch, 2), dtype=jnp.float32)
    target = jax.random.normal(k2, (batch, 2), dtype=jnp.float32)

    loss = jax.block_until_ready(ultra_weighted_loss(pred, target, gap_weight=50.0))
    ref = _reference_loss(pred, target, gap_weight=50.0)
    assert jnp.allclose(loss, ref, rtol=1e-5, atol=1e-5), (loss, ref)

    # Batch not divisible by anything special -> exercises the zero padding.
    batch2 = 1000
    pred2 = jax.random.normal(k3, (batch2, 2), dtype=jnp.float32)
    target2 = jax.random.normal(k4, (batch2, 2), dtype=jnp.float32)

    loss2 = jax.block_until_ready(ultra_weighted_loss(pred2, target2, gap_weight=50.0))
    ref2 = _reference_loss(pred2, target2, gap_weight=50.0)
    assert jnp.allclose(loss2, ref2, rtol=1e-5, atol=1e-5), (loss2, ref2)

    # Small data but forced-small tiles: exercises the multi-block accumulator path,
    # the two-way split (parallel outer axis), and ragged-tail padding.
    batch3 = 20000
    pred3 = jax.random.normal(k5, (batch3, 2), dtype=jnp.float32)
    target3 = jax.random.normal(k6, (batch3, 2), dtype=jnp.float32)

    loss3 = jax.block_until_ready(
        ultra_weighted_loss(pred3, target3, gap_weight=50.0, max_tile_rows=64))
    ref3 = _reference_loss(pred3, target3, gap_weight=50.0)
    assert jnp.allclose(loss3, ref3, rtol=1e-4, atol=1e-4), (loss3, ref3)

    print("KERNEL_OK")
</pallas_src>

<mosaic_0001>
module attributes {stable_mosaic.version = 11 : i64} {
  func.func @_ultra_weighted_loss_kernel(%arg0: i32, %arg1: i32, %arg2: memref<64x128xf32, #tpu.memory_space<vmem>>, %arg3: memref<64x128xf32, #tpu.memory_space<vmem>>, %arg4: memref<1x1xf32, #tpu.memory_space<vmem>>, %arg5: memref<64x128xf32, #tpu.memory_space<vmem>>) attributes {dimension_semantics = [#tpu.dimension_semantics<parallel>, #tpu.dimension_semantics<arbitrary>], iteration_bounds = array<i64: 1, 1>, scalar_prefetch = 0 : i64, scratch_operands = 1 : i64, tpu.core_type = #tpu.core_type<tc>, window_params = [{transform_indices = @transform_0, window_bounds = array<i64: 64, 128>}, {transform_indices = @transform_1, window_bounds = array<i64: 64, 128>}, {transform_indices = @transform_2, window_bounds = array<i64: 1, 1>}]} {
    %c0_i32 = arith.constant 0 : i32
    %0 = arith.cmpi eq, %arg1, %c0_i32 : i32
    %1 = arith.extui %0 : i1 to i32
    %c0_i32_0 = arith.constant 0 : i32
    %2 = arith.cmpi ne, %1, %c0_i32_0 : i32
    scf.if %2 {
      %cst_10 = arith.constant 0.000000e+00 : f32
      %15 = vector.broadcast %cst_10 : f32 to vector<64x128xf32>
      %c0_11 = arith.constant 0 : index
      %c0_12 = arith.constant 0 : index
      %16 = vector.load %arg5[%c0_11, %c0_12] : memref<64x128xf32, #tpu.memory_space<vmem>>, vector<64x128xf32>
      tpu.vector_store %arg5[%c0_11, %c0_12], %15 {strides = array<i32>} : memref<64x128xf32, #tpu.memory_space<vmem>>, vector<64x128xf32>,
    } else {
    }
    %c0 = arith.constant 0 : index
    %c0_1 = arith.constant 0 : index
    %3 = vector.load %arg2[%c0, %c0_1] : memref<64x128xf32, #tpu.memory_space<vmem>>, vector<64x128xf32>
    %c0_2 = arith.constant 0 : index
    %c0_3 = arith.constant 0 : index
    %4 = vector.load %arg3[%c0_2, %c0_3] : memref<64x128xf32, #tpu.memory_space<vmem>>, vector<64x128xf32>
    %5 = arith.subf %3, %4 : vector<64x128xf32>
    %6 = arith.mulf %5, %5 : vector<64x128xf32>
    %c0_4 = arith.constant 0 : index
    %c0_5 = arith.constant 0 : index
    %7 = vector.load %arg5[%c0_4, %c0_5] : memref<64x128xf32, #tpu.memory_space<vmem>>, vector<64x128xf32>
    %8 = vector.shape_cast %6 : vector<64x128xf32> to vector<1x64x128xf32>
    %cst = arith.constant dense<0.000000e+00> : vector<64x128xf32>
    %9 = vector.multi_reduction <add>, %8, %cst [0] : vector<1x64x128xf32> to vector<64x128xf32>
    %10 = arith.addf %7, %9 : vector<64x128xf32>
    %c0_6 = arith.constant 0 : index
    %c0_7 = arith.constant 0 : index
    %11 = vector.load %arg5[%c0_6, %c0_7] : memref<64x128xf32, #tpu.memory_space<vmem>>, vector<64x128xf32>
    tpu.vector_store %arg5[%c0_6, %c0_7], %10 {strides = array<i32>} : memref<64x128xf32, #tpu.memory_space<vmem>>, vector<64x128xf32>,
    %c0_i32_8 = arith.constant 0 : i32
    %12 = arith.cmpi eq, %arg1, %c0_i32_8 : i32
    %13 = arith.extui %12 : i1 to i32
    %c0_i32_9 = arith.constant 0 : i32
    %14 = arith.cmpi ne, %13, %c0_i32_9 : i32
    scf.if %14 {
      %15 = tpu.iota {dimensions = array<i32: 1>} : vector<64x128xi32>
      %c2_i32 = arith.constant 2 : i32
      %c0_i32_10 = arith.constant 0 : i32
      %16 = arith.cmpi eq, %c2_i32, %c0_i32_10 : i32
      %c1_i32 = arith.constant 1 : i32
      %17 = arith.select %16, %c1_i32, %c2_i32 : i32
      %18 = vector.broadcast %17 : i32 to vector<64x128xi32>
      %19 = arith.remsi %15, %18 : vector<64x128xi32>
      %c0_i32_11 = arith.constant 0 : i32
      %20 = vector.broadcast %c0_i32_11 : i32 to vector<64x128xi32>
      %21 = arith.cmpi ne, %19, %20 : vector<64x128xi32>
      %c0_i32_12 = arith.constant 0 : i32
      %22 = vector.broadcast %c0_i32_12 : i32 to vector<64x128xi32>
      %23 = arith.cmpi slt, %19, %22 : vector<64x128xi32>
      %c0_i32_13 = arith.constant 0 : i32
      %24 = arith.cmpi slt, %17, %c0_i32_13 : i32
      %25 = vector.broadcast %24 : i1 to vector<64x128xi1>
      %26 = vector.broadcast %25 : vector<64x128xi1> to vector<64x128xi1>
      %27 = arith.xori %23, %26 : vector<64x128xi1>
      %28 = arith.andi %27, %21 : vector<64x128xi1>
      %29 = vector.broadcast %17 : i32 to vector<64x128xi32>
      %30 = arith.addi %19, %29 : vector<64x128xi32>
      %31 = arith.select %28, %30, %19 : vector<64x128xi1>, vector<64x128xi32>
      %c0_i32_14 = arith.constant 0 : i32
      %32 = vector.broadcast %c0_i32_14 : i32 to vector<64x128xi32>
      %33 = arith.cmpi eq, %31, %32 : vector<64x128xi32>
      %cst_15 = arith.constant 1.000000e+00 : f32
      %cst_16 = arith.constant 5.000000e+01 : f32
      %34 = vector.broadcast %cst_15 : f32 to vector<64x128xf32>
      %35 = vector.broadcast %cst_16 : f32 to vector<64x128xf32>
      %36 = arith.select %33, %34, %35 : vector<64x128xi1>, vector<64x128xf32>
      %c0_17 = arith.constant 0 : index
      %c0_18 = arith.constant 0 : index
      %37 = vector.load %arg5[%c0_17, %c0_18] : memref<64x128xf32, #tpu.memory_space<vmem>>, vector<64x128xf32>
      %38 = arith.mulf %37, %36 : vector<64x128xf32>
      %39 = vector.shape_cast %38 : vector<64x128xf32> to vector<1x64x128xf32>
      %cst_19 = arith.constant dense<0.000000e+00> : vector<1xf32>
      %40 = vector.multi_reduction <add>, %39, %cst_19 [1, 2] : vector<1x64x128xf32> to vector<1xf32>
      %41 = vector.shape_cast %40 : vector<1xf32> to vector<1x1x1xf32>
      %42 = vector.extract %41[0, 0, 0] : f32 from vector<1x1x1xf32>
      %43 = vector.broadcast %42 : f32 to vector<1x1xf32>
      %cst_20 = arith.constant 6.250000e-02 : f32
      %44 = vector.broadcast %cst_20 : f32 to vector<1x1xf32>
      %45 = arith.mulf %43, %44 : vector<1x1xf32>
      %c0_21 = arith.constant 0 : index
      %c0_22 = arith.constant 0 : index
      %46 = vector.load %arg4[%c0_21, %c0_22] : memref<1x1xf32, #tpu.memory_space<vmem>>, vector<1x1xf32>
      tpu.vector_store %arg4[%c0_21, %c0_22], %45 {strides = array<i32>} : memref<1x1xf32, #tpu.memory_space<vmem>>, vector<1x1xf32>,
    } else {
    }
    return
  }
  func.func @transform_0(%arg0: i32, %arg1: i32) -> (i32, i32) {
    %c1_i32 = arith.constant 1 : i32
    %0 = arith.muli %arg0, %c1_i32 : i32
    %1 = arith.addi %0, %arg1 : i32
    %c0_i32 = arith.constant 0 : i32
    %c0_i32_0 = arith.constant 0 : i32
    return %1, %c0_i32 : i32, i32
  }
  func.func @transform_1(%arg0: i32, %arg1: i32) -> (i32, i32) {
    %c1_i32 = arith.constant 1 : i32
    %0 = arith.muli %arg0, %c1_i32 : i32
    %1 = arith.addi %0, %arg1 : i32
    %c0_i32 = arith.constant 0 : i32
    %c0_i32_0 = arith.constant 0 : i32
    return %1, %c0_i32 : i32, i32
  }
  func.func @transform_2(%arg0: i32, %arg1: i32) -> (i32, i32) {
    %c0_i32 = arith.constant 0 : i32
    %c0_i32_0 = arith.constant 0 : i32
    return %arg0, %c0_i32 : i32, i32
  }
}

</mosaic_0001>

<llo_original>
// kernel: tpu_custom_call.1
$region0: #{tpu_custom_call.1}
  #allocation0 [shape = 'u32[]', space=smem, size = 0x4, offset = 0x4, fixed_abs, tag = 'smem constant byte address 0x4 - core index']
  #allocation1 [shape = 'u32[144,128]{1,0:T(1,128)}', space=vmem, size = 0x12000, scoped, tag = 'internal scratch']
  #allocation2 [shape = 'f32[64,128]{1,0:T(8,128)}', space=vmem, size = 0x8000, scoped, tag = 'scratch operand']
  %s0 = inlined_call_operand.hbm [shape: f32[64,128], index: 0, kind: input, shape index: {}]
  %s1 = inlined_call_operand.hbm [shape: f32[64,128], index: 1, kind: input, shape index: {}]
  %s2 = inlined_call_operand.hbm [shape: f32[1,1], index: 2, kind: output, shape index: {}]
  %s3 = sld [smem:[#allocation0]]
  $region34: #{tpu_custom_call.1} parent=0
    _
  %s5 = ssub.s32 1, %s3
  %s6 = scalar_select 0, %s5, %s3
  $region1: #{tpu_custom_call.1} parent=0
    #allocation3 [shape = 'u8[32768]{0}', space=vmem, size = 0x8000, scoped, tag = 'input window, operand 0, single buffered']
    #allocation4 [shape = 's32[1]{0}', space=sflag, size = 0x4, scoped, tag = 'scoped memory for tpu_custom_call.1']
    #allocation5 [shape = 's32[1]{0}', space=sflag, size = 0x4, scoped, tag = 'scoped memory for tpu_custom_call.1']
    #allocation6 [shape = 'u8[32768]{0}', space=vmem, size = 0x8000, scoped, tag = 'input window, operand 1, single buffered']
    #allocation7 [shape = 's32[1]{0}', space=sflag, size = 0x4, scoped, tag = 'scoped memory for tpu_custom_call.1']
    #allocation8 [shape = 'u8[512]{0}', space=vmem, size = 0x400, scoped, tag = 'output window, operand 0, single buffered']
    %7 = vsyncpa [#allocation4], 0
    %8 = vsyncpa [#allocation7], 0
    %9 = vsyncpa [#allocation5], 0
    // Predicated region
    $region2: #{tpu_custom_call.1} parent=1 // pred_check
      _
    $region3: #{tpu_custom_call.1} parent=1 // pred_check_branch
      %11 = sbr.rel (0) target = $region5
    $region4: #{tpu_custom_call.1} parent=1 // pred_region
      %s12 = sadd.s32 0, 0
      %s13 = smul.u32 8, %s12
      %s15 = ssub.s32 1024, 1024
      %16 = vsyncadd [#allocation4], %s15
      %s17 = smul.addr %s13, 128
      %s18 = scalar_lea.hbm %s0, %s17
      %s19 = sshll.u32 [#allocation3], 4
      %s20 = int_to_ptr.vmem [resolvable:$true] %s19
      %25 = dma.hbm_to_vmem [thread:$0]  %s18, 1024, %s20, [#allocation4], 128, 128, 8
    $region5: #{tpu_custom_call.1} parent=1 // pred_fallthru
      _
    // Predicated region
    $region6: #{tpu_custom_call.1} parent=1 // pred_check
      _
    $region7: #{tpu_custom_call.1} parent=1 // pred_check_branch
      %27 = sbr.rel (0) target = $region9
    $region8: #{tpu_custom_call.1} parent=1 // pred_region
      %s28 = sadd.s32 0, 0
      %s29 = smul.u32 8, %s28
      %s31 = ssub.s32 1024, 1024
      %32 = vsyncadd [#allocation7], %s31
      %s33 = smul.addr %s29, 128
      %s34 = scalar_lea.hbm %s1, %s33
      %s35 = sshll.u32 [#allocation6], 4
      %s36 = int_to_ptr.vmem [resolvable:$true] %s35
      %41 = dma.hbm_to_vmem [thread:$0]  %s34, 1024, %s36, [#allocation7], 128, 128, 8
    $region9: #{tpu_custom_call.1} parent=1 // pred_fallthru
      _
    // Predicated region
    $region10: #{tpu_custom_call.1} parent=1 // pred_check
      _
    $region11: #{tpu_custom_call.1} parent=1 // pred_check_branch
      %43 = sbr.rel (0) target = $region13
    $region12: #{tpu_custom_call.1} parent=1 // pred_region
      %44 = dma.done [#allocation4], 1024
    $region13: #{tpu_custom_call.1} parent=1 // pred_fallthru
      _
    // Predicated region
    $region14: #{tpu_custom_call.1} parent=1 // pred_check
      _
    $region15: #{tpu_custom_call.1} parent=1 // pred_check_branch
      %46 = sbr.rel (0) target = $region17
    $region16: #{tpu_custom_call.1} parent=1 // pred_region
      %47 = dma.done [#allocation7], 1024
    $region17: #{tpu_custom_call.1} parent=1 // pred_fallthru
      _
    %s48 = sadd.s32 0, 0
    %s49 = smul.u32 8, %s48
    %s50 = sadd.s32 0, 0
    %s51 = smul.u32 8, %s50
    %p52 = scmp.eq.s32.totalorder 0, 0
    // Predicated region
    $region18: #{tpu_custom_call.1} parent=1 // pred_check
      %p53 = pneg %p52
    $region19: #{tpu_custom_call.1} parent=1 // pred_check_branch
      %55 = sbr.rel (%p53) target = $region21
    $region20: #{tpu_custom_call.1} parent=1 // pred_region
      %56 = vst [vmem:[#allocation2] sm:$0xff] 0.0
      %57 = vst [vmem:[#allocation2 + $0x8] sm:$0xff] 0.0
      %58 = vst [vmem:[#allocation2 + $0x10] sm:$0xff] 0.0
      %59 = vst [vmem:[#allocation2 + $0x18] sm:$0xff] 0.0
      %60 = vst [vmem:[#allocation2 + $0x20] sm:$0xff] 0.0
      %61 = vst [vmem:[#allocation2 + $0x28] sm:$0xff] 0.0
      %62 = vst [vmem:[#allocation2 + $0x30] sm:$0xff] 0.0
      %63 = vst [vmem:[#allocation2 + $0x38] sm:$0xff] 0.0
    $region21: #{tpu_custom_call.1} parent=1 // pred_fallthru
      _
    %v64 = vld [vmem:[#allocation3] sm:$0xff]
    %v65 = vld [vmem:[#allocation3 + $0x8] sm:$0xff]
    %v66 = vld [vmem:[#allocation3 + $0x10] sm:$0xff]
    %v67 = vld [vmem:[#allocation3 + $0x18] sm:$0xff]
    %v68 = vld [vmem:[#allocation3 + $0x20] sm:$0xff]
    %v69 = vld [vmem:[#allocation3 + $0x28] sm:$0xff]
    %v70 = vld [vmem:[#allocation3 + $0x30] sm:$0xff]
    %v71 = vld [vmem:[#allocation3 + $0x38] sm:$0xff]
    %v72 = vld [vmem:[#allocation6] sm:$0xff]
    %v73 = vld [vmem:[#allocation6 + $0x8] sm:$0xff]
    %v74 = vld [vmem:[#allocation6 + $0x10] sm:$0xff]
    %v75 = vld [vmem:[#allocation6 + $0x18] sm:$0xff]
    %v76 = vld [vmem:[#allocation6 + $0x20] sm:$0xff]
    %v77 = vld [vmem:[#allocation6 + $0x28] sm:$0xff]
    %v78 = vld [vmem:[#allocation6 + $0x30] sm:$0xff]
    %v79 = vld [vmem:[#allocation6 + $0x38] sm:$0xff]
    %v80 = vsub.f32 %v64, %v72
    %v81 = vsub.f32 %v65, %v73
    %v82 = vsub.f32 %v66, %v74
    %v83 = vsub.f32 %v67, %v75
    %v84 = vsub.f32 %v68, %v76
    %v85 = vsub.f32 %v69, %v77
    %v86 = vsub.f32 %v70, %v78
    %v87 = vsub.f32 %v71, %v79
    %v88 = vmul.f32 %v80, %v80
    %v89 = vmul.f32 %v81, %v81
    %v90 = vmul.f32 %v82, %v82
    %v91 = vmul.f32 %v83, %v83
    %v92 = vmul.f32 %v84, %v84
    %v93 = vmul.f32 %v85, %v85
    %v94 = vmul.f32 %v86, %v86
    %v95 = vmul.f32 %v87, %v87
    %v96 = vld [vmem:[#allocation2] sm:$0xff]
    %v97 = vld [vmem:[#allocation2 + $0x8] sm:$0xff]
    %v98 = vld [vmem:[#allocation2 + $0x10] sm:$0xff]
    %v99 = vld [vmem:[#allocation2 + $0x18] sm:$0xff]
    %v100 = vld [vmem:[#allocation2 + $0x20] sm:$0xff]
    %v101 = vld [vmem:[#allocation2 + $0x28] sm:$0xff]
    %v102 = vld [vmem:[#allocation2 + $0x30] sm:$0xff]
    %v103 = vld [vmem:[#allocation2 + $0x38] sm:$0xff]
    %v104 = vadd.f32 %v88, 0.0
    %v105 = vadd.f32 %v89, 0.0
    %v106 = vadd.f32 %v90, 0.0
    %v107 = vadd.f32 %v91, 0.0
    %v108 = vadd.f32 %v92, 0.0
    %v109 = vadd.f32 %v93, 0.0
    %v110 = vadd.f32 %v94, 0.0
    %v111 = vadd.f32 %v95, 0.0
    %v112 = vadd.f32 %v96, %v104
    %v113 = vadd.f32 %v97, %v105
    %v114 = vadd.f32 %v98, %v106
    %v115 = vadd.f32 %v99, %v107
    %v116 = vadd.f32 %v100, %v108
    %v117 = vadd.f32 %v101, %v109
    %v118 = vadd.f32 %v102, %v110
    %v119 = vadd.f32 %v103, %v111
    %120 = vst [vmem:[#allocation2] sm:$0xff] %v112
    %121 = vst [vmem:[#allocation2 + $0x8] sm:$0xff] %v113
    %122 = vst [vmem:[#allocation2 + $0x10] sm:$0xff] %v114
    %123 = vst [vmem:[#allocation2 + $0x18] sm:$0xff] %v115
    %124 = vst [vmem:[#allocation2 + $0x20] sm:$0xff] %v116
    %125 = vst [vmem:[#allocation2 + $0x28] sm:$0xff] %v117
    %126 = vst [vmem:[#allocation2 + $0x30] sm:$0xff] %v118
    %127 = vst [vmem:[#allocation2 + $0x38] sm:$0xff] %v119
    // Predicated region
    $region22: #{tpu_custom_call.1} parent=1 // pred_check
      %p128 = pneg %p52
    $region23: #{tpu_custom_call.1} parent=1 // pred_check_branch
      %130 = sbr.rel (%p128) target = $region25
    $region24: #{tpu_custom_call.1} parent=1 // pred_region
      %v131 = vlaneseq
      %v132 = vand.u32 %v131, 127
      %vm133 = vcmp.lt.s32.totalorder %v132, 0
      %v134 = vsub.s32 0, %v132
      %v135 = vsel %vm133, %v134, %v132
      %v136 = vshrl.u32 %v135, 1
      %v137 = vand.u32 %v135, 1
      %v138 = vsub.s32 0, %v137
      %v139 = vsel %vm133, %v138, %v137
      %vm140 = vcmp.ne.s32.totalorder %v139, 0
      %vm141 = vcmp.lt.s32.totalorder %v139, 0
      %vm142 = vmand %vm141, %vm140
      %v143 = vadd.s32 %v139, 2
      %v144 = vsel %vm142, %v143, %v139
      %vm145 = vcmp.eq.s32.totalorder %v144, 0
      %v146 = vsel %vm145, 1.0, 50.0
      %v147 = vld [vmem:[#allocation2] sm:$0xff]
      %v148 = vld [vmem:[#allocation2 + $0x8] sm:$0xff]
      %v149 = vld [vmem:[#allocation2 + $0x10] sm:$0xff]
      %v150 = vld [vmem:[#allocation2 + $0x18] sm:$0xff]
      %v151 = vld [vmem:[#allocation2 + $0x20] sm:$0xff]
      %v152 = vld [vmem:[#allocation2 + $0x28] sm:$0xff]
      %v153 = vld [vmem:[#allocation2 + $0x30] sm:$0xff]
      %v154 = vld [vmem:[#allocation2 + $0x38] sm:$0xff]
      %v155 = vmul.f32 %v147, %v146
      %v156 = vmul.f32 %v148, %v146
      %v157 = vmul.f32 %v149, %v146
      %v158 = vmul.f32 %v150, %v146
      %v159 = vmul.f32 %v151, %v146
      %v160 = vmul.f32 %v152, %v146
      %v161 = vmul.f32 %v153, %v146
      %v162 = vmul.f32 %v154, %v146
      %v163 = vadd.f32 %v155, %v156
      %v164 = vadd.f32 %v163, %v157
      %v165 = vadd.f32 %v164, %v158
      %v166 = vadd.f32 %v165, %v159
      %v167 = vadd.f32 %v166, %v160
      %v168 = vadd.f32 %v167, %v161
      %v169 = vadd.f32 %v168, %v162
      %170 = vadd.xlane.f32.xlu0 %v169
      %v171 = vpop.xlane.xlu0 %170
      %v172 = vrot.slane %v171, 4
      %v173 = vadd.f32 %v171, %v172
      %v174 = vrot.slane %v173, 2
      %v175 = vadd.f32 %v173, %v174
      %v176 = vrot.slane %v175, 1
      %v177 = vadd.f32 %v175, %v176
      %s178 = vtos %v177
      %v179 = vstv %s178
      %v180 = vmul.f32 %v179, 0.0625
      %vm181 = vcmask 0
      %182 = vst.msk [vmem:[#allocation8] sm:$0x1] %vm181, %v180
    $region25: #{tpu_custom_call.1} parent=1 // pred_fallthru
      _
    // Predicated region
    $region26: #{tpu_custom_call.1} parent=1 // pred_check
      _
    $region27: #{tpu_custom_call.1} parent=1 // pred_check_branch
      %184 = sbr.rel (0) target = $region29
    $region28: #{tpu_custom_call.1} parent=1 // pred_region
      %s186 = ssub.s32 16, 16
      %187 = vsyncadd [#allocation5], %s186
      %s189 = sshll.u32 [#allocation8], 4
      %s190 = int_to_ptr.vmem [resolvable:$true] %s189
      %192 = dma.vmem_to_hbm [thread:$0]  %s190, 16, %s2, [#allocation5]
    $region29: #{tpu_custom_call.1} parent=1 // pred_fallthru
      _
    // Predicated region
    $region30: #{tpu_custom_call.1} parent=1 // pred_check
      _
    $region31: #{tpu_custom_call.1} parent=1 // pred_check_branch
      %194 = sbr.rel (0) target = $region33
    $region32: #{tpu_custom_call.1} parent=1 // pred_region
      %195 = dma.done [#allocation5], 16
    $region33: #{tpu_custom_call.1} parent=1 // pred_fallthru
      _
    %196 = vsyncpa [#allocation4], 1
    %197 = vsyncpa [#allocation7], 1
    %198 = vsyncpa [#allocation5], 1

</llo_original>
